<compile_context>
chip_gen: v5e
topology: v5e:2x2
jax: 0.10.0
libtpu: 0.0.40
codegen_flags: <defaults>
</compile_context>

<pallas_src>
import jax
import jax.numpy as jnp
import numpy as np
from jax import lax
from jax.experimental import pallas as pl
from jax.experimental.pallas import tpu as pltpu

EPS = 1e-5
LANES = 128


# ----------------------------- helpers -------------------------------------


def _round_up(x, m):
    return (x + m - 1) // m * m


def _vmem_clamp():
    """Generation-aware vmem_limit ceiling: ~100 MiB on 128-MiB parts (v5e/v6e),
    ~52 MiB on 64-MiB parts (v7x) so Mosaic scratch / pipeline buffers still fit."""
    cap = 64 << 20  # conservative fallback (v7x-sized)
    try:
        info = pltpu.get_tpu_info()
        cap = int(getattr(info, "vmem_capacity_bytes", cap) or cap)
    except Exception:
        pass
    if cap <= (64 << 20):
        return 52 << 20
    return min(100 << 20, int(cap * 0.8))


def _pass_a_need(tn, l, cpi, cpo):
    """VMEM for one pass-A step: double-buffered declared blocks + kernel-body temporaries."""
    x2 = tn * l * cpi * 2           # bf16 input block
    h2b = tn * l * cpo * 2          # bf16 h1 output block
    h4 = tn * l * cpo * 4           # f32 matmul result
    decl = x2 + 3 * cpi * cpo * 2 + h2b + 8 * cpo * 4
    tmp = 5 * x2 + h4 + h2b         # xm/xp + im2col operand (3x) + f32 result + downcast
    return 2 * decl + tmp


def _pass_b_need(tn, l, cpo):
    a2 = tn * l * cpo * 2
    a4 = tn * l * cpo * 4
    decl = 2 * a2 + 2 * cpo * 4 + 3 * cpo * cpo * 2 + 8 * cpo * 4
    tmp = 3 * a4 + 6 * a2           # h1 upcast + BN f32 + f32 result; bf16 a/am/ap/im2col
    return 2 * decl + tmp


def _vmem_limit(need, clamp):
    return int(min(max(need + (4 << 20), 16 << 20), clamp))


def _choose_tile_n(n, l, cpi, cpo, clamp):
    """Largest batch tile that (a) divides N, (b) fits the heaviest pass within ~85% of the
    vmem clamp (temporaries included), (c) leaves >= 2 grid steps when N > 1 so both v7x
    TensorCores get work and the DMA pipeline can overlap."""
    budget = int(clamp * 0.85)
    best = 1
    for tn in range(1, n + 1):
        if n % tn:
            continue
        need = max(_pass_a_need(tn, l, cpi, cpo), _pass_b_need(tn, l, cpo)) + (4 << 20)
        if need > budget:
            continue
        if n > 1 and n // tn < 2:
            continue
        best = tn
    return best


def _partial_stats(h2d):
    """(8, C) block: row0 = sum, row1 = sumsq over the tile rows, rest zero (f32)."""
    s = jnp.sum(h2d, axis=0, keepdims=True)
    q = jnp.sum(h2d * h2d, axis=0, keepdims=True)
    pad = jnp.zeros((6, h2d.shape[1]), jnp.float32)
    return jnp.concatenate([s, q, pad], axis=0)


def _scale_shift(stats, count, gamma_p, beta_p):
    """Reduce per-tile partial sums -> per-channel BN scale/shift (training-mode stats)."""
    s = stats[:, 0, :].sum(axis=0)
    q = stats[:, 1, :].sum(axis=0)
    mean = s / count
    var = jnp.maximum(q / count - mean * mean, 0.0)     # biased variance, single pass (f32)
    scale = gamma_p * lax.rsqrt(var + EPS)
    shift = beta_p - mean * scale
    return scale.reshape(1, -1), shift.reshape(1, -1)


# ----------------------------- kernels --------------------------------------


def _conv1_stats_kernel(x_ref, w_ref, h1_ref, st_ref):
    tn, l, cpi = x_ref.shape
    cpo = h1_ref.shape[-1]
    x = x_ref[...]                                          # bf16, lane-dense channels
    z = jnp.zeros((tn, 1, cpi), x.dtype)
    xm = jnp.concatenate([z, x[:, : l - 1, :]], axis=1)     # x[l-1] (tap 0), zero top row
    xp = jnp.concatenate([x[:, 1:, :], z], axis=1)          # x[l+1] (tap 2), zero bottom row
    xc = jnp.concatenate([xm, x, xp], axis=-1)              # (tn, l, 3*cpi) im2col, bf16
    h = jnp.dot(xc.reshape(tn * l, 3 * cpi), w_ref[...],
                preferred_element_type=jnp.float32)         # single MXU matmul, K = 3*cpi
    h1_ref[...] = h.reshape(tn, l, cpo).astype(h1_ref.dtype)
    st_ref[...] = _partial_stats(h).reshape(1, 8, cpo)


def _bn1_relu_conv2_stats_kernel(h1_ref, sc_ref, sh_ref, w_ref, h2_ref, st_ref):
    tn, l, c = h1_ref.shape
    scale = sc_ref[...].reshape(1, 1, c)
    shift = sh_ref[...].reshape(1, 1, c)
    # BN1 folded to one FMA per element + ReLU, in f32.
    a = jnp.maximum(h1_ref[...].astype(jnp.float32) * scale + shift, 0.0)
    a = a.astype(jnp.bfloat16)                              # MXU input
    z = jnp.zeros((tn, 1, c), a.dtype)
    am = jnp.concatenate([z, a[:, : l - 1, :]], axis=1)
    ap = jnp.concatenate([a[:, 1:, :], z], axis=1)
    ac = jnp.concatenate([am, a, ap], axis=-1)              # (tn, l, 3*c) im2col, bf16
    h2 = jnp.dot(ac.reshape(tn * l, 3 * c), w_ref[...],
                 preferred_element_type=jnp.float32)
    h2_ref[...] = h2.reshape(tn, l, c).astype(h2_ref.dtype)
    st_ref[...] = _partial_stats(h2).reshape(1, 8, c)


# ----------------------------- wrapper --------------------------------------


@jax.jit
def conv_block_forward(x_ncl, params):
    """x_ncl: (N, C_in, L) float32, PyTorch NCL layout. Returns (N, C_out, L) float32."""
    w1, b1, g1, be1, w2, b2, g2, be2 = params
    # Conv biases are exactly cancelled by the training-mode BatchNorm mean subtraction.
    del b1, b2

    n, c_in, l = x_ncl.shape
    c_out = w1.shape[0]
    cpi = _round_up(c_in, LANES)    # padded (lane-dense) input channels
    cpo = _round_up(c_out, LANES)   # padded (lane-dense) output channels

    # NCL -> NLC (channels on the 128 lanes), bf16, lane-pad channels (one fused XLA op).
    x_nlc = jnp.pad(jnp.transpose(x_ncl, (0, 2, 1)).astype(jnp.bfloat16),
                    ((0, 0), (0, 0), (0, cpi - c_in)))

    # torch Conv1d weight (Cout, Cin, K=3) -> im2col-packed (3*Cin_pad, Cout_pad), bf16.
    def pack_w(w, ci, ci_p):
        wt = jnp.transpose(w, (2, 1, 0))                    # (3, Cin, Cout)
        wt = jnp.pad(wt, ((0, 0), (0, ci_p - ci), (0, cpo - c_out)))
        return wt.reshape(3 * ci_p, cpo).astype(jnp.bfloat16)

    w1_cat = pack_w(w1, c_in, cpi)
    w2_cat = pack_w(w2, c_out, cpo)
    g1_p = jnp.pad(g1.astype(jnp.float32), (0, cpo - c_out))
    be1_p = jnp.pad(be1.astype(jnp.float32), (0, cpo - c_out))
    g2_p = jnp.pad(g2.astype(jnp.float32), (0, cpo - c_out))
    be2_p = jnp.pad(be2.astype(jnp.float32), (0, cpo - c_out))

    clamp = _vmem_clamp()
    tn = _choose_tile_n(n, l, cpi, cpo, clamp)
    grid_n = n // tn
    count = float(n * l)

    tile = lambda c: pl.BlockSpec((tn, l, c), lambda i: (i, 0, 0))
    vec = pl.BlockSpec((1, cpo), lambda i: (0, 0))
    stat_spec = pl.BlockSpec((1, 8, cpo), lambda i: (i, 0, 0))

    # ---- pass A: conv1 (im2col matmul) + partial BN1 stats ---------------------------
    h1, st1 = pl.pallas_call(
        _conv1_stats_kernel,
        out_shape=(jax.ShapeDtypeStruct((n, l, cpo), jnp.bfloat16),
                   jax.ShapeDtypeStruct((grid_n, 8, cpo), jnp.float32)),
        grid_spec=pltpu.PrefetchScalarGridSpec(
            num_scalar_prefetch=0, grid=(grid_n,),
            in_specs=[tile(cpi), pl.BlockSpec((3 * cpi, cpo), lambda i: (0, 0))],
            out_specs=[tile(cpo), stat_spec]),
        compiler_params=pltpu.CompilerParams(
            dimension_semantics=("parallel",),
            vmem_limit_bytes=_vmem_limit(_pass_a_need(tn, l, cpi, cpo), clamp)),
    )(x_nlc, w1_cat)

    scale1, shift1 = _scale_shift(st1, count, g1_p, be1_p)

    # ---- pass B: bn1 + relu + conv2 (im2col matmul) + partial BN2 stats ---------------
    h2, st2 = pl.pallas_call(
        _bn1_relu_conv2_stats_kernel,
        out_shape=(jax.ShapeDtypeStruct((n, l, cpo), jnp.bfloat16),
                   jax.ShapeDtypeStruct((grid_n, 8, cpo), jnp.float32)),
        grid_spec=pltpu.PrefetchScalarGridSpec(
            num_scalar_prefetch=0, grid=(grid_n,),
            in_specs=[tile(cpo), vec, vec,
                      pl.BlockSpec((3 * cpo, cpo), lambda i: (0, 0))],
            out_specs=[tile(cpo), stat_spec]),
        compiler_params=pltpu.CompilerParams(
            dimension_semantics=("parallel",),
            vmem_limit_bytes=_vmem_limit(_pass_b_need(tn, l, cpo), clamp)),
    )(h1, scale1, shift1, w2_cat)

    scale2, shift2 = _scale_shift(st2, count, g2_p, be2_p)

    # ---- epilogue (former pass C): bn2 + relu, fused by XLA with slice + transpose ----
    sc2 = scale2[0, :c_out].reshape(1, 1, c_out)
    sh2 = shift2[0, :c_out].reshape(1, 1, c_out)
    y_nlc = jnp.maximum(h2[:, :, :c_out].astype(jnp.float32) * sc2 + sh2, 0.0)
    return jnp.transpose(y_nlc, (0, 2, 1))                  # back to PyTorch NCL layout


# ----------------------------- reference ------------------------------------


def _reference_forward(x_ncl, params, matmul_dtype=jnp.float32):
    """Pure-JAX reference mirroring the PyTorch module (training-mode BN).
    `matmul_dtype` mirrors the kernel's MXU input precision (f32 accumulation)."""
    w1, b1, g1, be1, w2, b2, g2, be2 = params

    def conv1d(x, w, b):
        y = lax.conv_general_dilated(
            x.astype(matmul_dtype), w.astype(matmul_dtype),
            window_strides=(1,), padding=[(1, 1)],
            dimension_numbers=('NCH', 'OIH', 'NCH'),
            preferred_element_type=jnp.float32)
        return y + b[None, :, None]

    def bn_relu(x, g, be):
        mu = jnp.mean(x, axis=(0, 2), keepdims=True)
        var = jnp.mean((x - mu) ** 2, axis=(0, 2), keepdims=True)
        y = (x - mu) * lax.rsqrt(var + EPS)
        y = y * g[None, :, None] + be[None, :, None]
        return jnp.maximum(y, 0.0)

    x = bn_relu(conv1d(x_ncl, w1, b1), g1, be1)
    x = bn_relu(conv1d(x, w2, b2), g2, be2)
    return x


if __name__ == "__main__":
    key = jax.random.PRNGKey(0)
    N, Cin, Cout, L = 2, 4, 8, 16

    keys = jax.random.split(key, 9)
    x = jax.random.normal(keys[0], (N, Cin, L), jnp.float32)

    # Deterministic synthetic parameters (shapes match nn.Conv1d / nn.BatchNorm1d).
    w1 = jax.random.normal(keys[1], (Cout, Cin, 3), jnp.float32) * 0.2
    b1 = jax.random.normal(keys[2], (Cout,), jnp.float32) * 0.1
    g1 = 1.0 + 0.1 * jax.random.normal(keys[3], (Cout,), jnp.float32)
    be1 = 0.1 * jax.random.normal(keys[4], (Cout,), jnp.float32)
    w2 = jax.random.normal(keys[5], (Cout, Cout, 3), jnp.float32) * 0.2
    b2 = jax.random.normal(keys[6], (Cout,), jnp.float32) * 0.1
    g2 = 1.0 + 0.1 * jax.random.normal(keys[7], (Cout,), jnp.float32)
    be2 = 0.1 * jax.random.normal(keys[8], (Cout,), jnp.float32)

    params = (w1, b1, g1, be1, w2, b2, g2, be2)

    out = jax.block_until_ready(conv_block_forward(x, params))

    # Reference mirrors the kernel's bf16 MXU-input precision (f32 accumulation, f32 BN math);
    # the kernel additionally stores h1/h2 in bf16, hence the slightly looser tolerance.
    ref = _reference_forward(x, params, matmul_dtype=jnp.bfloat16)
    np.testing.assert_allclose(np.asarray(out), np.asarray(ref), rtol=2e-2, atol=2e-2)

    print("KERNEL_OK")
</pallas_src>

<mosaic_0001>
module attributes {stable_mosaic.version = 11 : i64} {
  func.func @_conv1_stats_kernel(%arg0: i32, %arg1: memref<1x16x128xbf16, #tpu.memory_space<vmem>>, %arg2: memref<384x128xbf16, #tpu.memory_space<vmem>>, %arg3: memref<1x16x128xbf16, #tpu.memory_space<vmem>>, %arg4: memref<1x8x128xf32, #tpu.memory_space<vmem>>) attributes {dimension_semantics = [#tpu.dimension_semantics<parallel>], iteration_bounds = array<i64: 2>, scalar_prefetch = 0 : i64, scratch_operands = 0 : i64, tpu.core_type = #tpu.core_type<tc>, window_params = [{transform_indices = @transform_0, window_bounds = array<i64: 1, 16, 128>}, {pipeline_mode = #tpu.pipeline_mode<synchronous>, transform_indices = @transform_1, window_bounds = array<i64: 384, 128>}, {transform_indices = @transform_2, window_bounds = array<i64: 1, 16, 128>}, {transform_indices = @transform_3, window_bounds = array<i64: 1, 8, 128>}]} {
    %c0 = arith.constant 0 : index
    %c0_0 = arith.constant 0 : index
    %c0_1 = arith.constant 0 : index
    %0 = vector.load %arg1[%c0, %c0_0, %c0_1] : memref<1x16x128xbf16, #tpu.memory_space<vmem>>, vector<1x16x128xbf16>
    %cst = arith.constant 0.000000e+00 : bf16
    %1 = vector.broadcast %cst : bf16 to vector<1x1x128xbf16>
    %2 = vector.extract_strided_slice %0 {offsets = [0, 0, 0], sizes = [1, 15, 128], strides = [1, 1, 1]} : vector<1x16x128xbf16> to vector<1x15x128xbf16>
    %3 = tpu.concatenate %1, %2 in 1 : vector<1x1x128xbf16>, vector<1x15x128xbf16> -> vector<1x16x128xbf16>
    %4 = vector.extract_strided_slice %0 {offsets = [0, 1, 0], sizes = [1, 15, 128], strides = [1, 1, 1]} : vector<1x16x128xbf16> to vector<1x15x128xbf16>
    %5 = tpu.concatenate %4, %1 in 1 : vector<1x15x128xbf16>, vector<1x1x128xbf16> -> vector<1x16x128xbf16>
    %6 = tpu.concatenate %3, %0, %5 in 2 : vector<1x16x128xbf16>, vector<1x16x128xbf16>, vector<1x16x128xbf16> -> vector<1x16x384xbf16>
    %7 = vector.shape_cast %6 : vector<1x16x384xbf16> to vector<16x384xbf16>
    %c0_2 = arith.constant 0 : index
    %c0_3 = arith.constant 0 : index
    %8 = vector.load %arg2[%c0_2, %c0_3] : memref<384x128xbf16, #tpu.memory_space<vmem>>, vector<384x128xbf16>
    %cst_4 = arith.constant dense<0.000000e+00> : vector<16x128xf32>
    %9 = tpu.matmul %7, %8, %cst_4 {dimension_numbers = #tpu.dot_dimension_numbers<[1], [0], [0], [1], [0, 0, 1, 1], [], []>} : vector<16x384xbf16>, vector<384x128xbf16>, vector<16x128xf32> -> vector<16x128xf32>
    %10 = vector.shape_cast %9 : vector<16x128xf32> to vector<1x16x128xf32>
    %11 = arith.truncf %10 : vector<1x16x128xf32> to vector<1x16x128xbf16>
    %c0_5 = arith.constant 0 : index
    %c0_6 = arith.constant 0 : index
    %c0_7 = arith.constant 0 : index
    %12 = vector.load %arg3[%c0_5, %c0_6, %c0_7] : memref<1x16x128xbf16, #tpu.memory_space<vmem>>, vector<1x16x128xbf16>
    tpu.vector_store %arg3[%c0_5, %c0_6, %c0_7], %11 {strides = array<i32>} : memref<1x16x128xbf16, #tpu.memory_space<vmem>>, vector<1x16x128xbf16>,
    %cst_8 = arith.constant dense<0.000000e+00> : vector<128xf32>
    %13 = vector.multi_reduction <add>, %9, %cst_8 [0] : vector<16x128xf32> to vector<128xf32>
    %14 = vector.shape_cast %13 : vector<128xf32> to vector<1x128xf32>
    %15 = arith.mulf %9, %9 : vector<16x128xf32>
    %cst_9 = arith.constant dense<0.000000e+00> : vector<128xf32>
    %16 = vector.multi_reduction <add>, %15, %cst_9 [0] : vector<16x128xf32> to vector<128xf32>
    %17 = vector.shape_cast %16 : vector<128xf32> to vector<1x128xf32>
    %cst_10 = arith.constant 0.000000e+00 : f32
    %18 = vector.broadcast %cst_10 : f32 to vector<6x128xf32>
    %19 = tpu.concatenate %14, %17, %18 in 0 : vector<1x128xf32>, vector<1x128xf32>, vector<6x128xf32> -> vector<8x128xf32>
    %20 = vector.shape_cast %19 : vector<8x128xf32> to vector<1x8x128xf32>
    %c0_11 = arith.constant 0 : index
    %c0_12 = arith.constant 0 : index
    %c0_13 = arith.constant 0 : index
    %21 = vector.load %arg4[%c0_11, %c0_12, %c0_13] : memref<1x8x128xf32, #tpu.memory_space<vmem>>, vector<1x8x128xf32>
    tpu.vector_store %arg4[%c0_11, %c0_12, %c0_13], %20 {strides = array<i32>} : memref<1x8x128xf32, #tpu.memory_space<vmem>>, vector<1x8x128xf32>,
    return
  }
  func.func @transform_0(%arg0: i32) -> (i32, i32, i32) {
    %c0_i32 = arith.constant 0 : i32
    %c0_i32_0 = arith.constant 0 : i32
    %c0_i32_1 = arith.constant 0 : i32
    return %arg0, %c0_i32, %c0_i32_0 : i32, i32, i32
  }
  func.func @transform_1(%arg0: i32) -> (i32, i32) {
    %c0_i32 = arith.constant 0 : i32
    %c0_i32_0 = arith.constant 0 : i32
    %c0_i32_1 = arith.constant 0 : i32
    return %c0_i32, %c0_i32_0 : i32, i32
  }
  func.func @transform_2(%arg0: i32) -> (i32, i32, i32) {
    %c0_i32 = arith.constant 0 : i32
    %c0_i32_0 = arith.constant 0 : i32
    %c0_i32_1 = arith.constant 0 : i32
    return %arg0, %c0_i32, %c0_i32_0 : i32, i32, i32
  }
  func.func @transform_3(%arg0: i32) -> (i32, i32, i32) {
    %c0_i32 = arith.constant 0 : i32
    %c0_i32_0 = arith.constant 0 : i32
    %c0_i32_1 = arith.constant 0 : i32
    return %arg0, %c0_i32, %c0_i32_0 : i32, i32, i32
  }
}

module attributes {stable_mosaic.version = 11 : i64} {
  func.func @_bn1_relu_conv2_stats_kernel(%arg0: i32, %arg1: memref<1x16x128xbf16, #tpu.memory_space<vmem>>, %arg2: memref<1x128xf32, #tpu.memory_space<vmem>>, %arg3: memref<1x128xf32, #tpu.memory_space<vmem>>, %arg4: memref<384x128xbf16, #tpu.memory_space<vmem>>, %arg5: memref<1x16x128xbf16, #tpu.memory_space<vmem>>, %arg6: memref<1x8x128xf32, #tpu.memory_space<vmem>>) attributes {dimension_semantics = [#tpu.dimension_semantics<parallel>], iteration_bounds = array<i64: 2>, scalar_prefetch = 0 : i64, scratch_operands = 0 : i64, tpu.core_type = #tpu.core_type<tc>, window_params = [{transform_indices = @transform_0, window_bounds = array<i64: 1, 16, 128>}, {pipeline_mode = #tpu.pipeline_mode<synchronous>, transform_indices = @transform_1, window_bounds = array<i64: 1, 128>}, {pipeline_mode = #tpu.pipeline_mode<synchronous>, transform_indices = @transform_2, window_bounds = array<i64: 1, 128>}, {pipeline_mode = #tpu.pipeline_mode<synchronous>, transform_indices = @transform_3, window_bounds = array<i64: 384, 128>}, {transform_indices = @transform_4, window_bounds = array<i64: 1, 16, 128>}, {transform_indices = @transform_5, window_bounds = array<i64: 1, 8, 128>}]} {
    %c0 = arith.constant 0 : index
    %c0_0 = arith.constant 0 : index
    %0 = vector.load %arg2[%c0, %c0_0] : memref<1x128xf32, #tpu.memory_space<vmem>>, vector<1x128xf32>
    %1 = vector.shape_cast %0 : vector<1x128xf32> to vector<1x1x128xf32>
    %c0_1 = arith.constant 0 : index
    %c0_2 = arith.constant 0 : index
    %2 = vector.load %arg3[%c0_1, %c0_2] : memref<1x128xf32, #tpu.memory_space<vmem>>, vector<1x128xf32>
    %3 = vector.shape_cast %2 : vector<1x128xf32> to vector<1x1x128xf32>
    %c0_3 = arith.constant 0 : index
    %c0_4 = arith.constant 0 : index
    %c0_5 = arith.constant 0 : index
    %4 = vector.load %arg1[%c0_3, %c0_4, %c0_5] : memref<1x16x128xbf16, #tpu.memory_space<vmem>>, vector<1x16x128xbf16>
    %5 = arith.extf %4 : vector<1x16x128xbf16> to vector<1x16x128xf32>
    %6 = vector.broadcast %1 : vector<1x1x128xf32> to vector<1x16x128xf32>
    %7 = arith.mulf %5, %6 : vector<1x16x128xf32>
    %8 = vector.broadcast %3 : vector<1x1x128xf32> to vector<1x16x128xf32>
    %9 = arith.addf %7, %8 : vector<1x16x128xf32>
    %cst = arith.constant 0.000000e+00 : f32
    %10 = vector.broadcast %cst : f32 to vector<1x16x128xf32>
    %11 = arith.maximumf %9, %10 : vector<1x16x128xf32>
    %12 = arith.truncf %11 : vector<1x16x128xf32> to vector<1x16x128xbf16>
    %cst_6 = arith.constant 0.000000e+00 : bf16
    %13 = vector.broadcast %cst_6 : bf16 to vector<1x1x128xbf16>
    %14 = vector.extract_strided_slice %12 {offsets = [0, 0, 0], sizes = [1, 15, 128], strides = [1, 1, 1]} : vector<1x16x128xbf16> to vector<1x15x128xbf16>
    %15 = tpu.concatenate %13, %14 in 1 : vector<1x1x128xbf16>, vector<1x15x128xbf16> -> vector<1x16x128xbf16>
    %16 = vector.extract_strided_slice %12 {offsets = [0, 1, 0], sizes = [1, 15, 128], strides = [1, 1, 1]} : vector<1x16x128xbf16> to vector<1x15x128xbf16>
    %17 = tpu.concatenate %16, %13 in 1 : vector<1x15x128xbf16>, vector<1x1x128xbf16> -> vector<1x16x128xbf16>
    %18 = tpu.concatenate %15, %12, %17 in 2 : vector<1x16x128xbf16>, vector<1x16x128xbf16>, vector<1x16x128xbf16> -> vector<1x16x384xbf16>
    %19 = vector.shape_cast %18 : vector<1x16x384xbf16> to vector<16x384xbf16>
    %c0_7 = arith.constant 0 : index
    %c0_8 = arith.constant 0 : index
    %20 = vector.load %arg4[%c0_7, %c0_8] : memref<384x128xbf16, #tpu.memory_space<vmem>>, vector<384x128xbf16>
    %cst_9 = arith.constant dense<0.000000e+00> : vector<16x128xf32>
    %21 = tpu.matmul %19, %20, %cst_9 {dimension_numbers = #tpu.dot_dimension_numbers<[1], [0], [0], [1], [0, 0, 1, 1], [], []>} : vector<16x384xbf16>, vector<384x128xbf16>, vector<16x128xf32> -> vector<16x128xf32>
    %22 = vector.shape_cast %21 : vector<16x128xf32> to vector<1x16x128xf32>
    %23 = arith.truncf %22 : vector<1x16x128xf32> to vector<1x16x128xbf16>
    %c0_10 = arith.constant 0 : index
    %c0_11 = arith.constant 0 : index
    %c0_12 = arith.constant 0 : index
    %24 = vector.load %arg5[%c0_10, %c0_11, %c0_12] : memref<1x16x128xbf16, #tpu.memory_space<vmem>>, vector<1x16x128xbf16>
    tpu.vector_store %arg5[%c0_10, %c0_11, %c0_12], %23 {strides = array<i32>} : memref<1x16x128xbf16, #tpu.memory_space<vmem>>, vector<1x16x128xbf16>,
    %cst_13 = arith.constant dense<0.000000e+00> : vector<128xf32>
    %25 = vector.multi_reduction <add>, %21, %cst_13 [0] : vector<16x128xf32> to vector<128xf32>
    %26 = vector.shape_cast %25 : vector<128xf32> to vector<1x128xf32>
    %27 = arith.mulf %21, %21 : vector<16x128xf32>
    %cst_14 = arith.constant dense<0.000000e+00> : vector<128xf32>
    %28 = vector.multi_reduction <add>, %27, %cst_14 [0] : vector<16x128xf32> to vector<128xf32>
    %29 = vector.shape_cast %28 : vector<128xf32> to vector<1x128xf32>
    %cst_15 = arith.constant 0.000000e+00 : f32
    %30 = vector.broadcast %cst_15 : f32 to vector<6x128xf32>
    %31 = tpu.concatenate %26, %29, %30 in 0 : vector<1x128xf32>, vector<1x128xf32>, vector<6x128xf32> -> vector<8x128xf32>
    %32 = vector.shape_cast %31 : vector<8x128xf32> to vector<1x8x128xf32>
    %c0_16 = arith.constant 0 : index
    %c0_17 = arith.constant 0 : index
    %c0_18 = arith.constant 0 : index
    %33 = vector.load %arg6[%c0_16, %c0_17, %c0_18] : memref<1x8x128xf32, #tpu.memory_space<vmem>>, vector<1x8x128xf32>
    tpu.vector_store %arg6[%c0_16, %c0_17, %c0_18], %32 {strides = array<i32>} : memref<1x8x128xf32, #tpu.memory_space<vmem>>, vector<1x8x128xf32>,
    return
  }
  func.func @transform_0(%arg0: i32) -> (i32, i32, i32) {
    %c0_i32 = arith.constant 0 : i32
    %c0_i32_0 = arith.constant 0 : i32
    %c0_i32_1 = arith.constant 0 : i32
    return %arg0, %c0_i32, %c0_i32_0 : i32, i32, i32
  }
  func.func @transform_1(%arg0: i32) -> (i32, i32) {
    %c0_i32 = arith.constant 0 : i32
    %c0_i32_0 = arith.constant 0 : i32
    %c0_i32_1 = arith.constant 0 : i32
    return %c0_i32, %c0_i32_0 : i32, i32
  }
  func.func @transform_2(%arg0: i32) -> (i32, i32) {
    %c0_i32 = arith.constant 0 : i32
    %c0_i32_0 = arith.constant 0 : i32
    %c0_i32_1 = arith.constant 0 : i32
    return %c0_i32, %c0_i32_0 : i32, i32
  }
  func.func @transform_3(%arg0: i32) -> (i32, i32) {
    %c0_i32 = arith.constant 0 : i32
    %c0_i32_0 = arith.constant 0 : i32
    %c0_i32_1 = arith.constant 0 : i32
    return %c0_i32, %c0_i32_0 : i32, i32
  }
  func.func @transform_4(%arg0: i32) -> (i32, i32, i32) {
    %c0_i32 = arith.constant 0 : i32
    %c0_i32_0 = arith.constant 0 : i32
    %c0_i32_1 = arith.constant 0 : i32
    return %arg0, %c0_i32, %c0_i32_0 : i32, i32, i32
  }
  func.func @transform_5(%arg0: i32) -> (i32, i32, i32) {
    %c0_i32 = arith.constant 0 : i32
    %c0_i32_0 = arith.constant 0 : i32
    %c0_i32_1 = arith.constant 0 : i32
    return %arg0, %c0_i32, %c0_i32_0 : i32, i32, i32
  }
}

</mosaic_0001>

<llo_original>
// kernel: conv_block_forward.2
$region0: #{conv_block_forward.2}
  #allocation0 [shape = 'u32[]', space=smem, size = 0x4, offset = 0x4, fixed_abs, tag = 'smem constant byte address 0x4 - core index']
  #allocation1 [shape = 'u32[72,128]{1,0:T(1,128)}', space=vmem, size = 0x9000, scoped, tag = 'internal scratch']
  %s0 = inlined_call_operand.vmem [shape: bf16[2,16,128], index: 0, kind: input, shape index: {}]
  %s1 = inlined_call_operand.vmem [shape: bf16[384,128], index: 1, kind: input, shape index: {}]
  %s2 = inlined_call_operand.vmem [shape: bf16[2,16,128], index: 2, kind: output, shape index: {0}]
  %s3 = inlined_call_operand.vmem [shape: f32[2,8,128], index: 3, kind: output, shape index: {1}]
  %4 = xla_tuple %s2, %s3
  %s5 = sld [smem:[#allocation0]]
  $region49: #{conv_block_forward.2} parent=0
    _
  %s7 = ssub.s32 1, %s5
  %s8 = scalar_select 0, %s7, %s5
  loop: start=0, step=1, limit=4
  $region2: #{conv_block_forward.2} parent=0 // loop_pre_header
    _
  $region3: #{conv_block_forward.2} parent=0 // loop_header
    %s10 = sphi 0, %s14
    %p11 = scmp.ge.s32.totalorder %s10, 4
    %s20 = sphi 0, %s22
    %s23 = sphi 0, %s20
    %s24 = sphi 0, %s23
    %s40 = sphi 0, %s24
    %s44 = sphi 0, %s44
    %s46 = sphi 0, %s44
    %s47 = sphi 0, %s46
    %s61 = sphi 0, %s47
    %s67 = sphi 0, %s69
    %s70 = sphi 0, %s67
    %s71 = sphi 0, %s70
    %s87 = sphi 0, %s71
    %s93 = sphi 0, %s95
    %s96 = sphi 0, %s93
    %s97 = sphi 0, %s96
    %s113 = sphi 0, %s97
  $region4: #{conv_block_forward.2} parent=0 // loop_header_branch
    %13 = sbr.rel (%p11) target = $region8
  $region5: #{conv_block_forward.2} parent=0 // loop_body
    %s15 = ssub.s32 %s10, 1
    %s16 = ssub.s32 %s10, 2
    %s17 = sadd.s32 %s10, 1
    %s18 = ssub.s32 %s10, %s17
    %p19 = scmp.eq.s32.totalorder %s18, 0
    %s21 = sadd.s32 %s20, 1
    %s22 = scalar_select %p19, %s20, %s21
    %p25 = pneg %p19
    %p26 = scmp.eq.s32.totalorder %s10, 1
    %p27 = por %p25, %p26
    %p28 = scmp.ne.s32.totalorder %s20, %s23
    %p29 = scmp.eq.s32.totalorder %s10, 0
    %p30 = por %p28, %p29
    %p31 = scmp.ne.s32.totalorder %s20, %s23
    %p32 = scmp.eq.s32.totalorder %s15, 1
    %p33 = por %p31, %p32
    %p34 = scmp.ne.s32.totalorder %s23, %s24
    %p35 = scmp.eq.s32.totalorder %s15, 0
    %p36 = por %p34, %p35
    %p37 = scmp.ne.s32.totalorder %s23, %s24
    %p38 = scmp.eq.s32.totalorder %s16, 1
    %p39 = por %p37, %p38
    %p41 = scmp.ne.s32.totalorder %s24, %s40
    %p42 = scmp.eq.s32.totalorder %s16, 0
    %p43 = por %p41, %p42
    %s45 = sadd.s32 %s44, 1
    %p48 = scmp.eq.s32.totalorder %s10, 1
    %p49 = scmp.ne.s32.totalorder %s44, %s46
    %p50 = scmp.eq.s32.totalorder %s10, 0
    %p51 = por %p49, %p50
    %p52 = scmp.ne.s32.totalorder %s44, %s46
    %p53 = scmp.eq.s32.totalorder %s15, 1
    %p54 = por %p52, %p53
    %p55 = scmp.ne.s32.totalorder %s46, %s47
    %p56 = scmp.eq.s32.totalorder %s15, 0
    %p57 = por %p55, %p56
    %p58 = scmp.ne.s32.totalorder %s46, %s47
    %p59 = scmp.eq.s32.totalorder %s16, 1
    %p60 = por %p58, %p59
    %p62 = scmp.ne.s32.totalorder %s47, %s61
    %p63 = scmp.eq.s32.totalorder %s16, 0
    %p64 = por %p62, %p63
    %s65 = ssub.s32 %s10, %s17
    %p66 = scmp.eq.s32.totalorder %s65, 0
    %s68 = sadd.s32 %s67, 1
    %s69 = scalar_select %p66, %s67, %s68
    %p72 = pneg %p66
    %p73 = scmp.eq.s32.totalorder %s10, 1
    %p74 = por %p72, %p73
    %p75 = scmp.ne.s32.totalorder %s67, %s70
    %p76 = scmp.eq.s32.totalorder %s10, 0
    %p77 = por %p75, %p76
    %p78 = scmp.ne.s32.totalorder %s67, %s70
    %p79 = scmp.eq.s32.totalorder %s15, 1
    %p80 = por %p78, %p79
    %p81 = scmp.ne.s32.totalorder %s70, %s71
    %p82 = scmp.eq.s32.totalorder %s15, 0
    %p83 = por %p81, %p82
    %p84 = scmp.ne.s32.totalorder %s70, %s71
    %p85 = scmp.eq.s32.totalorder %s16, 1
    %p86 = por %p84, %p85
    %p88 = scmp.ne.s32.totalorder %s71, %s87
    %p89 = scmp.eq.s32.totalorder %s16, 0
    %p90 = por %p88, %p89
    %s91 = ssub.s32 %s10, %s17
    %p92 = scmp.eq.s32.totalorder %s91, 0
    %s94 = sadd.s32 %s93, 1
    %s95 = scalar_select %p92, %s93, %s94
    %p98 = pneg %p92
    %p99 = scmp.eq.s32.totalorder %s10, 1
    %p100 = por %p98, %p99
    %p101 = scmp.ne.s32.totalorder %s93, %s96
    %p102 = scmp.eq.s32.totalorder %s10, 0
    %p103 = por %p101, %p102
    %p104 = scmp.ne.s32.totalorder %s93, %s96
    %p105 = scmp.eq.s32.totalorder %s15, 1
    %p106 = por %p104, %p105
    %p107 = scmp.ne.s32.totalorder %s96, %s97
    %p108 = scmp.eq.s32.totalorder %s15, 0
    %p109 = por %p107, %p108
    %p110 = scmp.ne.s32.totalorder %s96, %s97
    %p111 = scmp.eq.s32.totalorder %s16, 1
    %p112 = por %p110, %p111
    %p114 = scmp.ne.s32.totalorder %s97, %s113
    %p115 = scmp.eq.s32.totalorder %s16, 0
    %p116 = por %p114, %p115
    %p117 = scmp.le.s32.totalorder 1, %s10
    %p118 = scmp.lt.s32.totalorder %s10, 3
    %p119 = pnand %p117, %p118
    %p120 = pneg %p119
    // Predicated region
    $region9: #{conv_block_forward.2} parent=5 // pred_check
      _
    $region10: #{conv_block_forward.2} parent=5 // pred_check_branch
      %122 = sbr.rel (%p119) target = $region12
    $region11: #{conv_block_forward.2} parent=5 // pred_region
      %s123 = ssub.s32 %s10, 1
      // Predicated region
      $region13: #{conv_block_forward.2} parent=11 // pred_check
        %p124 = pneg %p57
      $region14: #{conv_block_forward.2} parent=11 // pred_check_branch
        %126 = sbr.rel (%p124) target = $region16
      $region15: #{conv_block_forward.2} parent=11 // pred_region
        _
      $region16: #{conv_block_forward.2} parent=11 // pred_fallthru
        _
    $region12: #{conv_block_forward.2} parent=5 // pred_fallthru
      _
    %p127 = scmp.lt.s32.totalorder %s10, 2
    // Predicated region
    $region17: #{conv_block_forward.2} parent=5 // pred_check
      %p128 = pneg %p127
    $region18: #{conv_block_forward.2} parent=5 // pred_check_branch
      %130 = sbr.rel (%p128) target = $region20
    $region19: #{conv_block_forward.2} parent=5 // pred_region
      // Predicated region
      $region21: #{conv_block_forward.2} parent=19 // pred_check
        %p131 = pneg %p30
      $region22: #{conv_block_forward.2} parent=19 // pred_check_branch
        %133 = sbr.rel (%p131) target = $region24
      $region23: #{conv_block_forward.2} parent=19 // pred_region
        %p134 = scmp.lt.s32.totalorder %s10, 1
        %s135 = scalar_select %p134, %s10, 1
        %s136 = smul.addr %s135, 2
        %s137 = smul.addr %s136, 4
        %s138 = scalar_lea.vmem %s0, %s137
      $region24: #{conv_block_forward.2} parent=19 // pred_fallthru
        _
    $region20: #{conv_block_forward.2} parent=5 // pred_fallthru
      _
    %p139 = scmp.le.s32.totalorder 1, %s10
    %p140 = scmp.lt.s32.totalorder %s10, 3
    %p141 = pnand %p139, %p140
    %p142 = pneg %p141
    // Predicated region
    $region25: #{conv_block_forward.2} parent=5 // pred_check
      _
    $region26: #{conv_block_forward.2} parent=5 // pred_check_branch
      %144 = sbr.rel (%p141) target = $region28
    $region27: #{conv_block_forward.2} parent=5 // pred_region
      %s145 = ssub.s32 %s10, 1
      %p146 = scmp.lt.s32.totalorder %s15, 1
      %s147 = scalar_select %p146, %s15, 1
      %s148 = smul.addr %s147, 2
      %s149 = smul.addr %s148, 4
      %s150 = scalar_lea.vmem %s0, %s149
      %p151 = pneg %p36
      %p152 = pneg %p33
      %p153 = pneg %p57
      %p154 = pneg %p54
      %p155 = pneg %p83
      %p156 = pneg %p80
      %p157 = scmp.lt.s32.totalorder %s15, 1
      %s158 = scalar_select %p157, %s15, 1
      %s159 = smul.addr %s158, 2
      %s160 = smul.addr %s159, 4
      %s161 = scalar_lea.vmem %s2, %s160
      %p162 = pneg %p109
      %p163 = pneg %p106
      %p164 = scmp.lt.s32.totalorder %s15, 1
      %s165 = scalar_select %p164, %s15, 1
      %s166 = smul.addr %s165, 8
      %s167 = scalar_lea.vmem %s3, %s166
      %p168 = scmp.lt.s32.totalorder %s15, 1
      %s169 = scalar_select %p168, %s15, 1
      %s170 = smul.addr %s169, 2
      %s171 = smul.addr %s170, 4
      %s172 = scalar_lea.vmem %s0, %s171
      %p173 = scmp.lt.s32.totalorder %s15, 1
      %s174 = scalar_select %p173, %s15, 1
      %s175 = smul.addr %s174, 2
      %s176 = smul.addr %s175, 4
      %s177 = scalar_lea.vmem %s2, %s176
      %p178 = scmp.lt.s32.totalorder %s15, 1
      %s179 = scalar_select %p178, %s15, 1
      %s180 = smul.addr %s179, 8
      %s181 = scalar_lea.vmem %s3, %s180
      %v183 = vld [vmem:[%s172] sm:$0xf]
      %v184 = vld [vmem:[%s172 + $0x4] sm:$0xf]
      %v187 = vunpack.c.l.b16 %v183
      %v188 = vunpack.c.l.b16 %v184
      %v189 = vpack.c.b16 %v188, %v187
      %v191 = vshrl.u32 %v189, 16
      %v193 = vrot.slane %v191, 7
      %v194 = vshll.u32 %v189, 16
      %v196 = vor.u32 %v193, %v194
      %vm198 = vcmask 1040384
      %vm199 = vsmask.f32 256
      %vm200 = vmand %vm198, %vm199
      %v201 = vsel %vm200, 0, %v196
      %v202 = vrot.slane %v194, 1
      %v203 = vor.u32 %v191, %v202
      %vm205 = vcmask 1047552
      %vm206 = vsmask.f32 7424
      %vm207 = vmand %vm205, %vm206
      %v208 = vsel %vm207, %v203, 0
      %v210 = vld [vmem:[%s1] sm:$0xf]
      %v211 = vld [vmem:[%s1 + $0x4] sm:$0xf]
      %v212 = vld [vmem:[%s1 + $0x8] sm:$0xf]
      %v213 = vld [vmem:[%s1 + $0xc] sm:$0xf]
      %v214 = vld [vmem:[%s1 + $0x10] sm:$0xf]
      %v215 = vld [vmem:[%s1 + $0x14] sm:$0xf]
      %v216 = vld [vmem:[%s1 + $0x18] sm:$0xf]
      %v217 = vld [vmem:[%s1 + $0x1c] sm:$0xf]
      %v218 = vld [vmem:[%s1 + $0x20] sm:$0xf]
      %v219 = vld [vmem:[%s1 + $0x24] sm:$0xf]
      %v220 = vld [vmem:[%s1 + $0x28] sm:$0xf]
      %v221 = vld [vmem:[%s1 + $0x2c] sm:$0xf]
      %v222 = vld [vmem:[%s1 + $0x30] sm:$0xf]
      %v223 = vld [vmem:[%s1 + $0x34] sm:$0xf]
      %v224 = vld [vmem:[%s1 + $0x38] sm:$0xf]
      %v225 = vld [vmem:[%s1 + $0x3c] sm:$0xf]
      %v226 = vld [vmem:[%s1 + $0x40] sm:$0xf]
      %v227 = vld [vmem:[%s1 + $0x44] sm:$0xf]
      %v228 = vld [vmem:[%s1 + $0x48] sm:$0xf]
      %v229 = vld [vmem:[%s1 + $0x4c] sm:$0xf]
      %v230 = vld [vmem:[%s1 + $0x50] sm:$0xf]
      %v231 = vld [vmem:[%s1 + $0x54] sm:$0xf]
      %v232 = vld [vmem:[%s1 + $0x58] sm:$0xf]
      %v233 = vld [vmem:[%s1 + $0x5c] sm:$0xf]
      %v234 = vld [vmem:[%s1 + $0x60] sm:$0xf]
      %v235 = vld [vmem:[%s1 + $0x64] sm:$0xf]
      %v236 = vld [vmem:[%s1 + $0x68] sm:$0xf]
      %v237 = vld [vmem:[%s1 + $0x6c] sm:$0xf]
      %v238 = vld [vmem:[%s1 + $0x70] sm:$0xf]
      %v239 = vld [vmem:[%s1 + $0x74] sm:$0xf]
      %v240 = vld [vmem:[%s1 + $0x78] sm:$0xf]
      %v241 = vld [vmem:[%s1 + $0x7c] sm:$0xf]
      %v242 = vld [vmem:[%s1 + $0x80] sm:$0xf]
      %v243 = vld [vmem:[%s1 + $0x84] sm:$0xf]
      %v244 = vld [vmem:[%s1 + $0x88] sm:$0xf]
      %v245 = vld [vmem:[%s1 + $0x8c] sm:$0xf]
      %v246 = vld [vmem:[%s1 + $0x90] sm:$0xf]
      %v247 = vld [vmem:[%s1 + $0x94] sm:$0xf]
      %v248 = vld [vmem:[%s1 + $0x98] sm:$0xf]
      %v249 = vld [vmem:[%s1 + $0x9c] sm:$0xf]
      %v250 = vld [vmem:[%s1 + $0xa0] sm:$0xf]
      %v251 = vld [vmem:[%s1 + $0xa4] sm:$0xf]
      %v252 = vld [vmem:[%s1 + $0xa8] sm:$0xf]
      %v253 = vld [vmem:[%s1 + $0xac] sm:$0xf]
      %v254 = vld [vmem:[%s1 + $0xb0] sm:$0xf]
      %v255 = vld [vmem:[%s1 + $0xb4] sm:$0xf]
      %v256 = vld [vmem:[%s1 + $0xb8] sm:$0xf]
      %v257 = vld [vmem:[%s1 + $0xbc] sm:$0xf]
      %v306 = vunpack.c.l.b16 %v210
      %v307 = vunpack.c.l.b16 %v211
      %v308 = vunpack.c.l.b16 %v212
      %v309 = vunpack.c.l.b16 %v213
      %v310 = vunpack.c.l.b16 %v214
      %v311 = vunpack.c.l.b16 %v215
      %v312 = vunpack.c.l.b16 %v216
      %v313 = vunpack.c.l.b16 %v217
      %v314 = vunpack.c.l.b16 %v218
      %v315 = vunpack.c.l.b16 %v219
      %v316 = vunpack.c.l.b16 %v220
      %v317 = vunpack.c.l.b16 %v221
      %v318 = vunpack.c.l.b16 %v222
      %v319 = vunpack.c.l.b16 %v223
      %v320 = vunpack.c.l.b16 %v224
      %v321 = vunpack.c.l.b16 %v225
      %v322 = vunpack.c.l.b16 %v226
      %v323 = vunpack.c.l.b16 %v227
      %v324 = vunpack.c.l.b16 %v228
      %v325 = vunpack.c.l.b16 %v229
      %v326 = vunpack.c.l.b16 %v230
      %v327 = vunpack.c.l.b16 %v231
      %v328 = vunpack.c.l.b16 %v232
      %v329 = vunpack.c.l.b16 %v233
      %v330 = vunpack.c.l.b16 %v234
      %v331 = vunpack.c.l.b16 %v235
      %v332 = vunpack.c.l.b16 %v236
      %v333 = vunpack.c.l.b16 %v237
      %v334 = vunpack.c.l.b16 %v238
      %v335 = vunpack.c.l.b16 %v239
      %v336 = vunpack.c.l.b16 %v240
      %v337 = vunpack.c.l.b16 %v241
      %v338 = vunpack.c.l.b16 %v242
      %v339 = vunpack.c.l.b16 %v243
      %v340 = vunpack.c.l.b16 %v244
      %v341 = vunpack.c.l.b16 %v245
      %v342 = vunpack.c.l.b16 %v246
      %v343 = vunpack.c.l.b16 %v247
      %v344 = vunpack.c.l.b16 %v248
      %v345 = vunpack.c.l.b16 %v249
      %v346 = vunpack.c.l.b16 %v250
      %v347 = vunpack.c.l.b16 %v251
      %v348 = vunpack.c.l.b16 %v252
      %v349 = vunpack.c.l.b16 %v253
      %v350 = vunpack.c.l.b16 %v254
      %v351 = vunpack.c.l.b16 %v255
      %v352 = vunpack.c.l.b16 %v256
      %v353 = vunpack.c.l.b16 %v257
      %v354 = vpack.c.b16 %v307, %v306
      %v355 = vpack.c.b16 %v309, %v308
      %v356 = vpack.c.b16 %v311, %v310
      %v357 = vpack.c.b16 %v313, %v312
      %v358 = vpack.c.b16 %v315, %v314
      %v359 = vpack.c.b16 %v317, %v316
      %v360 = vpack.c.b16 %v319, %v318
      %v361 = vpack.c.b16 %v321, %v320
      %v362 = vpack.c.b16 %v323, %v322
      %v363 = vpack.c.b16 %v325, %v324
      %v364 = vpack.c.b16 %v327, %v326
      %v365 = vpack.c.b16 %v329, %v328
      %v366 = vpack.c.b16 %v331, %v330
      %v367 = vpack.c.b16 %v333, %v332
      %v368 = vpack.c.b16 %v335, %v334
      %v369 = vpack.c.b16 %v337, %v336
      %v370 = vpack.c.b16 %v339, %v338
      %v371 = vpack.c.b16 %v341, %v340
      %v372 = vpack.c.b16 %v343, %v342
      %v373 = vpack.c.b16 %v345, %v344
      %v374 = vpack.c.b16 %v347, %v346
      %v375 = vpack.c.b16 %v349, %v348
      %v376 = vpack.c.b16 %v351, %v350
      %v377 = vpack.c.b16 %v353, %v352
      %402 = vmatpush.bf16.msra.mxu0 %v361
      %403 = vmatpush.bf16.msra.mxu0 %v360
      %404 = vmatpush.bf16.msra.mxu0 %v359
      %405 = vmatpush.bf16.msra.mxu0 %v358
      %406 = vmatpush.bf16.msra.mxu0 %v357
      %407 = vmatpush.bf16.msra.mxu0 %v356
      %408 = vmatpush.bf16.msra.mxu0 %v355
      %409 = vmatpush.bf16.msra.mxu0 %v354
      %410 = vmatmul.bf16.gmra.mxu0 %v201
      %v411 = vpop.f32.mrf.mxu0
      %v412 = vadd.f32 0.0, %v411
      %v413 = vpop.f32.mrf.mxu0
      %v414 = vadd.f32 0.0, %v413
      %415 = vdwg.mxu0
      %416 = vmatpush.bf16.msra.mxu0 %v369
      %417 = vmatpush.bf16.msra.mxu0 %v368
      %418 = vmatpush.bf16.msra.mxu0 %v367
      %419 = vmatpush.bf16.msra.mxu0 %v366
      %420 = vmatpush.bf16.msra.mxu0 %v365
      %421 = vmatpush.bf16.msra.mxu0 %v364
      %422 = vmatpush.bf16.msra.mxu0 %v363
      %423 = vmatpush.bf16.msra.mxu0 %v362
      %424 = vmatmul.bf16.gmra.mxu0 %v189
      %v425 = vpop.f32.mrf.mxu0
      %v426 = vadd.f32 %v412, %v425
      %v427 = vpop.f32.mrf.mxu0
      %v428 = vadd.f32 %v414, %v427
      %429 = vdwg.mxu0
      %430 = vmatpush.bf16.msra.mxu0 %v377
      %431 = vmatpush.bf16.msra.mxu0 %v376
      %432 = vmatpush.bf16.msra.mxu0 %v375
      %433 = vmatpush.bf16.msra.mxu0 %v374
      %434 = vmatpush.bf16.msra.mxu0 %v373
      %435 = vmatpush.bf16.msra.mxu0 %v372
      %436 = vmatpush.bf16.msra.mxu0 %v371
      %437 = vmatpush.bf16.msra.mxu0 %v370
      %438 = vmatmul.bf16.gmra.mxu0 %v208
      %v439 = vpop.f32.mrf.mxu0
      %v440 = vadd.f32 %v426, %v439
      %v441 = vpop.f32.mrf.mxu0
      %v442 = vadd.f32 %v428, %v441
      %443 = vdwg.mxu0
      %v444 = vpack.c.bf16 %v440, %v440
      %v445 = vpack.c.bf16 %v442, %v442
      %446 = vst [vmem:[%s177] sm:$0xf] %v444
      %447 = vst [vmem:[%s177 + $0x4] sm:$0xf] %v445
      %v448 = vadd.f32 %v440, %v442
      %v449 = vrot.slane %v448, 4
      %v450 = vadd.f32 %v448, %v449
      %v451 = vrot.slane %v450, 2
      %v452 = vadd.f32 %v450, %v451
      %v453 = vrot.slane %v452, 1
      %v454 = vadd.f32 %v452, %v453
      %v455 = vmul.f32 %v440, %v440
      %v456 = vmul.f32 %v442, %v442
      %v457 = vadd.f32 %v455, %v456
      %v458 = vrot.slane %v457, 4
      %v459 = vadd.f32 %v457, %v458
      %v460 = vrot.slane %v459, 2
      %v461 = vadd.f32 %v459, %v460
      %v462 = vrot.slane %v461, 1
      %v463 = vadd.f32 %v461, %v462
      %vm464 = vcmask 1040384
      %v465 = vsel %vm464, %v454, %v463
      %vm466 = vcmask 1041408
      %v467 = vsel %vm466, %v465, 0.0
      %468 = vst [vmem:[%s181] sm:$0xff] %v467
      %p469 = scmp.lt.s32.totalorder %s15, 1
      %s470 = scalar_select %p469, %s15, 1
      %s471 = smul.addr %s470, 2
      %s472 = smul.addr %s471, 4
      %s473 = scalar_lea.vmem %s2, %s472
      %p474 = scmp.lt.s32.totalorder %s15, 1
      %s475 = scalar_select %p474, %s15, 1
      %s476 = smul.addr %s475, 8
      %s477 = scalar_lea.vmem %s3, %s476
      // Predicated region
      $region29: #{conv_block_forward.2} parent=27 // pred_check
        %p478 = pneg %p80
      $region30: #{conv_block_forward.2} parent=27 // pred_check_branch
        %480 = sbr.rel (%p478) target = $region32
      $region31: #{conv_block_forward.2} parent=27 // pred_region
        _
      $region32: #{conv_block_forward.2} parent=27 // pred_fallthru
        _
      // Predicated region
      $region33: #{conv_block_forward.2} parent=27 // pred_check
        %p481 = pneg %p106
      $region34: #{conv_block_forward.2} parent=27 // pred_check_branch
        %483 = sbr.rel (%p481) target = $region36
      $region35: #{conv_block_forward.2} parent=27 // pred_region
        _
      $region36: #{conv_block_forward.2} parent=27 // pred_fallthru
        _
    $region28: #{conv_block_forward.2} parent=5 // pred_fallthru
      _
    %p484 = scmp.le.s32.totalorder 2, %s10
    // Predicated region
    $region37: #{conv_block_forward.2} parent=5 // pred_check
      %p485 = pneg %p484
    $region38: #{conv_block_forward.2} parent=5 // pred_check_branch
      %487 = sbr.rel (%p485) target = $region40
    $region39: #{conv_block_forward.2} parent=5 // pred_region
      %s488 = ssub.s32 %s10, 2
      // Predicated region
      $region41: #{conv_block_forward.2} parent=39 // pred_check
        %p489 = pneg %p86
      $region42: #{conv_block_forward.2} parent=39 // pred_check_branch
        %491 = sbr.rel (%p489) target = $region44
      $region43: #{conv_block_forward.2} parent=39 // pred_region
        %p492 = scmp.lt.s32.totalorder %s16, 1
        %s493 = scalar_select %p492, %s16, 1
        %s494 = smul.addr %s493, 2
        %s495 = smul.addr %s494, 4
        %s496 = scalar_lea.vmem %s2, %s495
      $region44: #{conv_block_forward.2} parent=39 // pred_fallthru
        _
      // Predicated region
      $region45: #{conv_block_forward.2} parent=39 // pred_check
        %p497 = pneg %p112
      $region46: #{conv_block_forward.2} parent=39 // pred_check_branch
        %499 = sbr.rel (%p497) target = $region48
      $region47: #{conv_block_forward.2} parent=39 // pred_region
        %p500 = scmp.lt.s32.totalorder %s16, 1
        %s501 = scalar_select %p500, %s16, 1
        %s502 = smul.addr %s501, 8
        %s503 = scalar_lea.vmem %s3, %s502
      $region48: #{conv_block_forward.2} parent=39 // pred_fallthru
        _
    $region40: #{conv_block_forward.2} parent=5 // pred_fallthru
      _
  $region6: #{conv_block_forward.2} parent=0 // loop_footer
    %s14 = sadd.s32 1, %s10
  $region7: #{conv_block_forward.2} parent=0 // loop_footer_branch
    %9 = sbr.rel target = $region3
  $region8: #{conv_block_forward.2} parent=0 // loop_exit
    _

// kernel: conv_block_forward.3
$region0: #{conv_block_forward.3}
  #allocation0 [shape = 'u32[]', space=smem, size = 0x4, offset = 0x4, fixed_abs, tag = 'smem constant byte address 0x4 - core index']
  #allocation1 [shape = 'u32[72,128]{1,0:T(1,128)}', space=vmem, size = 0x9000, scoped, tag = 'internal scratch']
  %s0 = inlined_call_operand.vmem [shape: bf16[2,16,128], index: 0, kind: input, shape index: {}]
  %s1 = inlined_call_operand.vmem [shape: f32[1,128], index: 1, kind: input, shape index: {}]
  %s2 = inlined_call_operand.vmem [shape: f32[1,128], index: 2, kind: input, shape index: {}]
  %s3 = inlined_call_operand.vmem [shape: bf16[384,128], index: 3, kind: input, shape index: {}]
  %s4 = inlined_call_operand.vmem [shape: bf16[2,16,128], index: 4, kind: output, shape index: {0}]
  %s5 = inlined_call_operand.vmem [shape: f32[2,8,128], index: 5, kind: output, shape index: {1}]
  %6 = xla_tuple %s4, %s5
  %s7 = sld [smem:[#allocation0]]
  $region57: #{conv_block_forward.3} parent=0
    _
  %s9 = ssub.s32 1, %s7
  %s10 = scalar_select 0, %s9, %s7
  loop: start=0, step=1, limit=4
  $region2: #{conv_block_forward.3} parent=0 // loop_pre_header
    _
  $region3: #{conv_block_forward.3} parent=0 // loop_header
    %s12 = sphi 0, %s16
    %p13 = scmp.ge.s32.totalorder %s12, 4
    %s22 = sphi 0, %s24
    %s25 = sphi 0, %s22
    %s26 = sphi 0, %s25
    %s42 = sphi 0, %s26
    %s46 = sphi 0, %s46
    %s48 = sphi 0, %s46
    %s49 = sphi 0, %s48
    %s63 = sphi 0, %s49
    %s67 = sphi 0, %s67
    %s69 = sphi 0, %s67
    %s70 = sphi 0, %s69
    %s84 = sphi 0, %s70
    %s88 = sphi 0, %s88
    %s90 = sphi 0, %s88
    %s91 = sphi 0, %s90
    %s105 = sphi 0, %s91
    %s111 = sphi 0, %s113
    %s114 = sphi 0, %s111
    %s115 = sphi 0, %s114
    %s131 = sphi 0, %s115
    %s137 = sphi 0, %s139
    %s140 = sphi 0, %s137
    %s141 = sphi 0, %s140
    %s157 = sphi 0, %s141
  $region4: #{conv_block_forward.3} parent=0 // loop_header_branch
    %15 = sbr.rel (%p13) target = $region8
  $region5: #{conv_block_forward.3} parent=0 // loop_body
    %s17 = ssub.s32 %s12, 1
    %s18 = ssub.s32 %s12, 2
    %s19 = sadd.s32 %s12, 1
    %s20 = ssub.s32 %s12, %s19
    %p21 = scmp.eq.s32.totalorder %s20, 0
    %s23 = sadd.s32 %s22, 1
    %s24 = scalar_select %p21, %s22, %s23
    %p27 = pneg %p21
    %p28 = scmp.eq.s32.totalorder %s12, 1
    %p29 = por %p27, %p28
    %p30 = scmp.ne.s32.totalorder %s22, %s25
    %p31 = scmp.eq.s32.totalorder %s12, 0
    %p32 = por %p30, %p31
    %p33 = scmp.ne.s32.totalorder %s22, %s25
    %p34 = scmp.eq.s32.totalorder %s17, 1
    %p35 = por %p33, %p34
    %p36 = scmp.ne.s32.totalorder %s25, %s26
    %p37 = scmp.eq.s32.totalorder %s17, 0
    %p38 = por %p36, %p37
    %p39 = scmp.ne.s32.totalorder %s25, %s26
    %p40 = scmp.eq.s32.totalorder %s18, 1
    %p41 = por %p39, %p40
    %p43 = scmp.ne.s32.totalorder %s26, %s42
    %p44 = scmp.eq.s32.totalorder %s18, 0
    %p45 = por %p43, %p44
    %s47 = sadd.s32 %s46, 1
    %p50 = scmp.eq.s32.totalorder %s12, 1
    %p51 = scmp.ne.s32.totalorder %s46, %s48
    %p52 = scmp.eq.s32.totalorder %s12, 0
    %p53 = por %p51, %p52
    %p54 = scmp.ne.s32.totalorder %s46, %s48
    %p55 = scmp.eq.s32.totalorder %s17, 1
    %p56 = por %p54, %p55
    %p57 = scmp.ne.s32.totalorder %s48, %s49
    %p58 = scmp.eq.s32.totalorder %s17, 0
    %p59 = por %p57, %p58
    %p60 = scmp.ne.s32.totalorder %s48, %s49
    %p61 = scmp.eq.s32.totalorder %s18, 1
    %p62 = por %p60, %p61
    %p64 = scmp.ne.s32.totalorder %s49, %s63
    %p65 = scmp.eq.s32.totalorder %s18, 0
    %p66 = por %p64, %p65
    %s68 = sadd.s32 %s67, 1
    %p71 = scmp.eq.s32.totalorder %s12, 1
    %p72 = scmp.ne.s32.totalorder %s67, %s69
    %p73 = scmp.eq.s32.totalorder %s12, 0
    %p74 = por %p72, %p73
    %p75 = scmp.ne.s32.totalorder %s67, %s69
    %p76 = scmp.eq.s32.totalorder %s17, 1
    %p77 = por %p75, %p76
    %p78 = scmp.ne.s32.totalorder %s69, %s70
    %p79 = scmp.eq.s32.totalorder %s17, 0
    %p80 = por %p78, %p79
    %p81 = scmp.ne.s32.totalorder %s69, %s70
    %p82 = scmp.eq.s32.totalorder %s18, 1
    %p83 = por %p81, %p82
    %p85 = scmp.ne.s32.totalorder %s70, %s84
    %p86 = scmp.eq.s32.totalorder %s18, 0
    %p87 = por %p85, %p86
    %s89 = sadd.s32 %s88, 1
    %p92 = scmp.eq.s32.totalorder %s12, 1
    %p93 = scmp.ne.s32.totalorder %s88, %s90
    %p94 = scmp.eq.s32.totalorder %s12, 0
    %p95 = por %p93, %p94
    %p96 = scmp.ne.s32.totalorder %s88, %s90
    %p97 = scmp.eq.s32.totalorder %s17, 1
    %p98 = por %p96, %p97
    %p99 = scmp.ne.s32.totalorder %s90, %s91
    %p100 = scmp.eq.s32.totalorder %s17, 0
    %p101 = por %p99, %p100
    %p102 = scmp.ne.s32.totalorder %s90, %s91
    %p103 = scmp.eq.s32.totalorder %s18, 1
    %p104 = por %p102, %p103
    %p106 = scmp.ne.s32.totalorder %s91, %s105
    %p107 = scmp.eq.s32.totalorder %s18, 0
    %p108 = por %p106, %p107
    %s109 = ssub.s32 %s12, %s19
    %p110 = scmp.eq.s32.totalorder %s109, 0
    %s112 = sadd.s32 %s111, 1
    %s113 = scalar_select %p110, %s111, %s112
    %p116 = pneg %p110
    %p117 = scmp.eq.s32.totalorder %s12, 1
    %p118 = por %p116, %p117
    %p119 = scmp.ne.s32.totalorder %s111, %s114
    %p120 = scmp.eq.s32.totalorder %s12, 0
    %p121 = por %p119, %p120
    %p122 = scmp.ne.s32.totalorder %s111, %s114
    %p123 = scmp.eq.s32.totalorder %s17, 1
    %p124 = por %p122, %p123
    %p125 = scmp.ne.s32.totalorder %s114, %s115
    %p126 = scmp.eq.s32.totalorder %s17, 0
    %p127 = por %p125, %p126
    %p128 = scmp.ne.s32.totalorder %s114, %s115
    %p129 = scmp.eq.s32.totalorder %s18, 1
    %p130 = por %p128, %p129
    %p132 = scmp.ne.s32.totalorder %s115, %s131
    %p133 = scmp.eq.s32.totalorder %s18, 0
    %p134 = por %p132, %p133
    %s135 = ssub.s32 %s12, %s19
    %p136 = scmp.eq.s32.totalorder %s135, 0
    %s138 = sadd.s32 %s137, 1
    %s139 = scalar_select %p136, %s137, %s138
    %p142 = pneg %p136
    %p143 = scmp.eq.s32.totalorder %s12, 1
    %p144 = por %p142, %p143
    %p145 = scmp.ne.s32.totalorder %s137, %s140
    %p146 = scmp.eq.s32.totalorder %s12, 0
    %p147 = por %p145, %p146
    %p148 = scmp.ne.s32.totalorder %s137, %s140
    %p149 = scmp.eq.s32.totalorder %s17, 1
    %p150 = por %p148, %p149
    %p151 = scmp.ne.s32.totalorder %s140, %s141
    %p152 = scmp.eq.s32.totalorder %s17, 0
    %p153 = por %p151, %p152
    %p154 = scmp.ne.s32.totalorder %s140, %s141
    %p155 = scmp.eq.s32.totalorder %s18, 1
    %p156 = por %p154, %p155
    %p158 = scmp.ne.s32.totalorder %s141, %s157
    %p159 = scmp.eq.s32.totalorder %s18, 0
    %p160 = por %p158, %p159
    %p161 = scmp.le.s32.totalorder 1, %s12
    %p162 = scmp.lt.s32.totalorder %s12, 3
    %p163 = pnand %p161, %p162
    %p164 = pneg %p163
    // Predicated region
    $region9: #{conv_block_forward.3} parent=5 // pred_check
      _
    $region10: #{conv_block_forward.3} parent=5 // pred_check_branch
      %166 = sbr.rel (%p163) target = $region12
    $region11: #{conv_block_forward.3} parent=5 // pred_region
      %s167 = ssub.s32 %s12, 1
      // Predicated region
      $region13: #{conv_block_forward.3} parent=11 // pred_check
        %p168 = pneg %p59
      $region14: #{conv_block_forward.3} parent=11 // pred_check_branch
        %170 = sbr.rel (%p168) target = $region16
      $region15: #{conv_block_forward.3} parent=11 // pred_region
        _
      $region16: #{conv_block_forward.3} parent=11 // pred_fallthru
        _
      // Predicated region
      $region17: #{conv_block_forward.3} parent=11 // pred_check
        %p171 = pneg %p80
      $region18: #{conv_block_forward.3} parent=11 // pred_check_branch
        %173 = sbr.rel (%p171) target = $region20
      $region19: #{conv_block_forward.3} parent=11 // pred_region
        _
      $region20: #{conv_block_forward.3} parent=11 // pred_fallthru
        _
      // Predicated region
      $region21: #{conv_block_forward.3} parent=11 // pred_check
        %p174 = pneg %p101
      $region22: #{conv_block_forward.3} parent=11 // pred_check_branch
        %176 = sbr.rel (%p174) target = $region24
      $region23: #{conv_block_forward.3} parent=11 // pred_region
        _
      $region24: #{conv_block_forward.3} parent=11 // pred_fallthru
        _
    $region12: #{conv_block_forward.3} parent=5 // pred_fallthru
      _
    %p177 = scmp.lt.s32.totalorder %s12, 2
    // Predicated region
    $region25: #{conv_block_forward.3} parent=5 // pred_check
      %p178 = pneg %p177
    $region26: #{conv_block_forward.3} parent=5 // pred_check_branch
      %180 = sbr.rel (%p178) target = $region28
    $region27: #{conv_block_forward.3} parent=5 // pred_region
      // Predicated region
      $region29: #{conv_block_forward.3} parent=27 // pred_check
        %p181 = pneg %p32
      $region30: #{conv_block_forward.3} parent=27 // pred_check_branch
        %183 = sbr.rel (%p181) target = $region32
      $region31: #{conv_block_forward.3} parent=27 // pred_region
        %p184 = scmp.lt.s32.totalorder %s12, 1
        %s185 = scalar_select %p184, %s12, 1
        %s186 = smul.addr %s185, 2
        %s187 = smul.addr %s186, 4
        %s188 = scalar_lea.vmem %s0, %s187
      $region32: #{conv_block_forward.3} parent=27 // pred_fallthru
        _
    $region28: #{conv_block_forward.3} parent=5 // pred_fallthru
      _
    %p189 = scmp.le.s32.totalorder 1, %s12
    %p190 = scmp.lt.s32.totalorder %s12, 3
    %p191 = pnand %p189, %p190
    %p192 = pneg %p191
    // Predicated region
    $region33: #{conv_block_forward.3} parent=5 // pred_check
      _
    $region34: #{conv_block_forward.3} parent=5 // pred_check_branch
      %194 = sbr.rel (%p191) target = $region36
    $region35: #{conv_block_forward.3} parent=5 // pred_region
      %s195 = ssub.s32 %s12, 1
      %p196 = scmp.lt.s32.totalorder %s17, 1
      %s197 = scalar_select %p196, %s17, 1
      %s198 = smul.addr %s197, 2
      %s199 = smul.addr %s198, 4
      %s200 = scalar_lea.vmem %s0, %s199
      %p201 = pneg %p38
      %p202 = pneg %p35
      %p203 = pneg %p59
      %p204 = pneg %p56
      %p205 = pneg %p80
      %p206 = pneg %p77
      %p207 = pneg %p101
      %p208 = pneg %p98
      %p209 = pneg %p127
      %p210 = pneg %p124
      %p211 = scmp.lt.s32.totalorder %s17, 1
      %s212 = scalar_select %p211, %s17, 1
      %s213 = smul.addr %s212, 2
      %s214 = smul.addr %s213, 4
      %s215 = scalar_lea.vmem %s4, %s214
      %p216 = pneg %p153
      %p217 = pneg %p150
      %p218 = scmp.lt.s32.totalorder %s17, 1
      %s219 = scalar_select %p218, %s17, 1
      %s220 = smul.addr %s219, 8
      %s221 = scalar_lea.vmem %s5, %s220
      %p222 = scmp.lt.s32.totalorder %s17, 1
      %s223 = scalar_select %p222, %s17, 1
      %s224 = smul.addr %s223, 2
      %s225 = smul.addr %s224, 4
      %s226 = scalar_lea.vmem %s0, %s225
      %p227 = scmp.lt.s32.totalorder %s17, 1
      %s228 = scalar_select %p227, %s17, 1
      %s229 = smul.addr %s228, 2
      %s230 = smul.addr %s229, 4
      %s231 = scalar_lea.vmem %s4, %s230
      %p232 = scmp.lt.s32.totalorder %s17, 1
      %s233 = scalar_select %p232, %s17, 1
      %s234 = smul.addr %s233, 8
      %s235 = scalar_lea.vmem %s5, %s234
      %v237 = vld [vmem:[%s1] sm:$0x1]
      %v238 = vld [vmem:[%s2] sm:$0x1]
      %v239 = vld [vmem:[%s226] sm:$0xf]
      %v240 = vld [vmem:[%s226 + $0x4] sm:$0xf]
      %v241 = vunpack.c.l.bf16 %v239
      %v242 = vunpack.c.l.bf16 %v240
      %v244 = vperm.slane %v237, 0
      %v246 = vmul.f32 %v241, %v244
      %v247 = vmul.f32 %v242, %v244
      %v249 = vperm.slane %v238, 0
      %v251 = vadd.f32 %v246, %v249
      %v252 = vadd.f32 %v247, %v249
      %v253 = vmax.f32 %v251, 0.0
      %v254 = vmax.f32 %v252, 0.0
      %v255 = vpack.c.bf16 %v253, %v253
      %v256 = vpack.c.bf16 %v254, %v254
      %v259 = vunpack.c.l.b16 %v255
      %v260 = vunpack.c.l.b16 %v256
      %v261 = vpack.c.b16 %v260, %v259
      %v263 = vshrl.u32 %v261, 16
      %v265 = vrot.slane %v263, 7
      %v266 = vshll.u32 %v261, 16
      %v268 = vor.u32 %v265, %v266
      %vm270 = vcmask 1040384
      %vm271 = vsmask.f32 256
      %vm272 = vmand %vm270, %vm271
      %v273 = vsel %vm272, 0, %v268
      %v274 = vrot.slane %v266, 1
      %v275 = vor.u32 %v263, %v274
      %vm277 = vcmask 1047552
      %vm278 = vsmask.f32 7424
      %vm279 = vmand %vm277, %vm278
      %v280 = vsel %vm279, %v275, 0
      %v282 = vld [vmem:[%s3] sm:$0xf]
      %v283 = vld [vmem:[%s3 + $0x4] sm:$0xf]
      %v284 = vld [vmem:[%s3 + $0x8] sm:$0xf]
      %v285 = vld [vmem:[%s3 + $0xc] sm:$0xf]
      %v286 = vld [vmem:[%s3 + $0x10] sm:$0xf]
      %v287 = vld [vmem:[%s3 + $0x14] sm:$0xf]
      %v288 = vld [vmem:[%s3 + $0x18] sm:$0xf]
      %v289 = vld [vmem:[%s3 + $0x1c] sm:$0xf]
      %v290 = vld [vmem:[%s3 + $0x20] sm:$0xf]
      %v291 = vld [vmem:[%s3 + $0x24] sm:$0xf]
      %v292 = vld [vmem:[%s3 + $0x28] sm:$0xf]
      %v293 = vld [vmem:[%s3 + $0x2c] sm:$0xf]
      %v294 = vld [vmem:[%s3 + $0x30] sm:$0xf]
      %v295 = vld [vmem:[%s3 + $0x34] sm:$0xf]
      %v296 = vld [vmem:[%s3 + $0x38] sm:$0xf]
      %v297 = vld [vmem:[%s3 + $0x3c] sm:$0xf]
      %v298 = vld [vmem:[%s3 + $0x40] sm:$0xf]
      %v299 = vld [vmem:[%s3 + $0x44] sm:$0xf]
      %v300 = vld [vmem:[%s3 + $0x48] sm:$0xf]
      %v301 = vld [vmem:[%s3 + $0x4c] sm:$0xf]
      %v302 = vld [vmem:[%s3 + $0x50] sm:$0xf]
      %v303 = vld [vmem:[%s3 + $0x54] sm:$0xf]
      %v304 = vld [vmem:[%s3 + $0x58] sm:$0xf]
      %v305 = vld [vmem:[%s3 + $0x5c] sm:$0xf]
      %v306 = vld [vmem:[%s3 + $0x60] sm:$0xf]
      %v307 = vld [vmem:[%s3 + $0x64] sm:$0xf]
      %v308 = vld [vmem:[%s3 + $0x68] sm:$0xf]
      %v309 = vld [vmem:[%s3 + $0x6c] sm:$0xf]
      %v310 = vld [vmem:[%s3 + $0x70] sm:$0xf]
      %v311 = vld [vmem:[%s3 + $0x74] sm:$0xf]
      %v312 = vld [vmem:[%s3 + $0x78] sm:$0xf]
      %v313 = vld [vmem:[%s3 + $0x7c] sm:$0xf]
      %v314 = vld [vmem:[%s3 + $0x80] sm:$0xf]
      %v315 = vld [vmem:[%s3 + $0x84] sm:$0xf]
      %v316 = vld [vmem:[%s3 + $0x88] sm:$0xf]
      %v317 = vld [vmem:[%s3 + $0x8c] sm:$0xf]
      %v318 = vld [vmem:[%s3 + $0x90] sm:$0xf]
      %v319 = vld [vmem:[%s3 + $0x94] sm:$0xf]
      %v320 = vld [vmem:[%s3 + $0x98] sm:$0xf]
      %v321 = vld [vmem:[%s3 + $0x9c] sm:$0xf]
      %v322 = vld [vmem:[%s3 + $0xa0] sm:$0xf]
      %v323 = vld [vmem:[%s3 + $0xa4] sm:$0xf]
      %v324 = vld [vmem:[%s3 + $0xa8] sm:$0xf]
      %v325 = vld [vmem:[%s3 + $0xac] sm:$0xf]
      %v326 = vld [vmem:[%s3 + $0xb0] sm:$0xf]
      %v327 = vld [vmem:[%s3 + $0xb4] sm:$0xf]
      %v328 = vld [vmem:[%s3 + $0xb8] sm:$0xf]
      %v329 = vld [vmem:[%s3 + $0xbc] sm:$0xf]
      %v378 = vunpack.c.l.b16 %v282
      %v379 = vunpack.c.l.b16 %v283
      %v380 = vunpack.c.l.b16 %v284
      %v381 = vunpack.c.l.b16 %v285
      %v382 = vunpack.c.l.b16 %v286
      %v383 = vunpack.c.l.b16 %v287
      %v384 = vunpack.c.l.b16 %v288
      %v385 = vunpack.c.l.b16 %v289
      %v386 = vunpack.c.l.b16 %v290
      %v387 = vunpack.c.l.b16 %v291
      %v388 = vunpack.c.l.b16 %v292
      %v389 = vunpack.c.l.b16 %v293
      %v390 = vunpack.c.l.b16 %v294
      %v391 = vunpack.c.l.b16 %v295
      %v392 = vunpack.c.l.b16 %v296
      %v393 = vunpack.c.l.b16 %v297
      %v394 = vunpack.c.l.b16 %v298
      %v395 = vunpack.c.l.b16 %v299
      %v396 = vunpack.c.l.b16 %v300
      %v397 = vunpack.c.l.b16 %v301
      %v398 = vunpack.c.l.b16 %v302
      %v399 = vunpack.c.l.b16 %v303
      %v400 = vunpack.c.l.b16 %v304
      %v401 = vunpack.c.l.b16 %v305
      %v402 = vunpack.c.l.b16 %v306
      %v403 = vunpack.c.l.b16 %v307
      %v404 = vunpack.c.l.b16 %v308
      %v405 = vunpack.c.l.b16 %v309
      %v406 = vunpack.c.l.b16 %v310
      %v407 = vunpack.c.l.b16 %v311
      %v408 = vunpack.c.l.b16 %v312
      %v409 = vunpack.c.l.b16 %v313
      %v410 = vunpack.c.l.b16 %v314
      %v411 = vunpack.c.l.b16 %v315
      %v412 = vunpack.c.l.b16 %v316
      %v413 = vunpack.c.l.b16 %v317
      %v414 = vunpack.c.l.b16 %v318
      %v415 = vunpack.c.l.b16 %v319
      %v416 = vunpack.c.l.b16 %v320
      %v417 = vunpack.c.l.b16 %v321
      %v418 = vunpack.c.l.b16 %v322
      %v419 = vunpack.c.l.b16 %v323
      %v420 = vunpack.c.l.b16 %v324
      %v421 = vunpack.c.l.b16 %v325
      %v422 = vunpack.c.l.b16 %v326
      %v423 = vunpack.c.l.b16 %v327
      %v424 = vunpack.c.l.b16 %v328
      %v425 = vunpack.c.l.b16 %v329
      %v426 = vpack.c.b16 %v379, %v378
      %v427 = vpack.c.b16 %v381, %v380
      %v428 = vpack.c.b16 %v383, %v382
      %v429 = vpack.c.b16 %v385, %v384
      %v430 = vpack.c.b16 %v387, %v386
      %v431 = vpack.c.b16 %v389, %v388
      %v432 = vpack.c.b16 %v391, %v390
      %v433 = vpack.c.b16 %v393, %v392
      %v434 = vpack.c.b16 %v395, %v394
      %v435 = vpack.c.b16 %v397, %v396
      %v436 = vpack.c.b16 %v399, %v398
      %v437 = vpack.c.b16 %v401, %v400
      %v438 = vpack.c.b16 %v403, %v402
      %v439 = vpack.c.b16 %v405, %v404
      %v440 = vpack.c.b16 %v407, %v406
      %v441 = vpack.c.b16 %v409, %v408
      %v442 = vpack.c.b16 %v411, %v410
      %v443 = vpack.c.b16 %v413, %v412
      %v444 = vpack.c.b16 %v415, %v414
      %v445 = vpack.c.b16 %v417, %v416
      %v446 = vpack.c.b16 %v419, %v418
      %v447 = vpack.c.b16 %v421, %v420
      %v448 = vpack.c.b16 %v423, %v422
      %v449 = vpack.c.b16 %v425, %v424
      %474 = vmatpush.bf16.msra.mxu0 %v433
      %475 = vmatpush.bf16.msra.mxu0 %v432
      %476 = vmatpush.bf16.msra.mxu0 %v431
      %477 = vmatpush.bf16.msra.mxu0 %v430
      %478 = vmatpush.bf16.msra.mxu0 %v429
      %479 = vmatpush.bf16.msra.mxu0 %v428
      %480 = vmatpush.bf16.msra.mxu0 %v427
      %481 = vmatpush.bf16.msra.mxu0 %v426
      %482 = vmatmul.bf16.gmra.mxu0 %v273
      %v483 = vpop.f32.mrf.mxu0
      %v484 = vadd.f32 0.0, %v483
      %v485 = vpop.f32.mrf.mxu0
      %v486 = vadd.f32 0.0, %v485
      %487 = vdwg.mxu0
      %488 = vmatpush.bf16.msra.mxu0 %v441
      %489 = vmatpush.bf16.msra.mxu0 %v440
      %490 = vmatpush.bf16.msra.mxu0 %v439
      %491 = vmatpush.bf16.msra.mxu0 %v438
      %492 = vmatpush.bf16.msra.mxu0 %v437
      %493 = vmatpush.bf16.msra.mxu0 %v436
      %494 = vmatpush.bf16.msra.mxu0 %v435
      %495 = vmatpush.bf16.msra.mxu0 %v434
      %496 = vmatmul.bf16.gmra.mxu0 %v261
      %v497 = vpop.f32.mrf.mxu0
      %v498 = vadd.f32 %v484, %v497
      %v499 = vpop.f32.mrf.mxu0
      %v500 = vadd.f32 %v486, %v499
      %501 = vdwg.mxu0
      %502 = vmatpush.bf16.msra.mxu0 %v449
      %503 = vmatpush.bf16.msra.mxu0 %v448
      %504 = vmatpush.bf16.msra.mxu0 %v447
      %505 = vmatpush.bf16.msra.mxu0 %v446
      %506 = vmatpush.bf16.msra.mxu0 %v445
      %507 = vmatpush.bf16.msra.mxu0 %v444
      %508 = vmatpush.bf16.msra.mxu0 %v443
      %509 = vmatpush.bf16.msra.mxu0 %v442
      %510 = vmatmul.bf16.gmra.mxu0 %v280
      %v511 = vpop.f32.mrf.mxu0
      %v512 = vadd.f32 %v498, %v511
      %v513 = vpop.f32.mrf.mxu0
      %v514 = vadd.f32 %v500, %v513
      %515 = vdwg.mxu0
      %v516 = vpack.c.bf16 %v512, %v512
      %v517 = vpack.c.bf16 %v514, %v514
      %518 = vst [vmem:[%s231] sm:$0xf] %v516
      %519 = vst [vmem:[%s231 + $0x4] sm:$0xf] %v517
      %v520 = vadd.f32 %v512, %v514
      %v521 = vrot.slane %v520, 4
      %v522 = vadd.f32 %v520, %v521
      %v523 = vrot.slane %v522, 2
      %v524 = vadd.f32 %v522, %v523
      %v525 = vrot.slane %v524, 1
      %v526 = vadd.f32 %v524, %v525
      %v527 = vmul.f32 %v512, %v512
      %v528 = vmul.f32 %v514, %v514
      %v529 = vadd.f32 %v527, %v528
      %v530 = vrot.slane %v529, 4
      %v531 = vadd.f32 %v529, %v530
      %v532 = vrot.slane %v531, 2
      %v533 = vadd.f32 %v531, %v532
      %v534 = vrot.slane %v533, 1
      %v535 = vadd.f32 %v533, %v534
      %vm536 = vcmask 1040384
      %v537 = vsel %vm536, %v526, %v535
      %vm538 = vcmask 1041408
      %v539 = vsel %vm538, %v537, 0.0
      %540 = vst [vmem:[%s235] sm:$0xff] %v539
      %p541 = scmp.lt.s32.totalorder %s17, 1
      %s542 = scalar_select %p541, %s17, 1
      %s543 = smul.addr %s542, 2
      %s544 = smul.addr %s543, 4
      %s545 = scalar_lea.vmem %s4, %s544
      %p546 = scmp.lt.s32.totalorder %s17, 1
      %s547 = scalar_select %p546, %s17, 1
      %s548 = smul.addr %s547, 8
      %s549 = scalar_lea.vmem %s5, %s548
      // Predicated region
      $region37: #{conv_block_forward.3} parent=35 // pred_check
        %p550 = pneg %p124
      $region38: #{conv_block_forward.3} parent=35 // pred_check_branch
        %552 = sbr.rel (%p550) target = $region40
      $region39: #{conv_block_forward.3} parent=35 // pred_region
        _
      $region40: #{conv_block_forward.3} parent=35 // pred_fallthru
        _
      // Predicated region
      $region41: #{conv_block_forward.3} parent=35 // pred_check
        %p553 = pneg %p150
      $region42: #{conv_block_forward.3} parent=35 // pred_check_branch
        %555 = sbr.rel (%p553) target = $region44
      $region43: #{conv_block_forward.3} parent=35 // pred_region
        _
      $region44: #{conv_block_forward.3} parent=35 // pred_fallthru
        _
    $region36: #{conv_block_forward.3} parent=5 // pred_fallthru
      _
    %p556 = scmp.le.s32.totalorder 2, %s12
    // Predicated region
    $region45: #{conv_block_forward.3} parent=5 // pred_check
      %p557 = pneg %p556
    $region46: #{conv_block_forward.3} parent=5 // pred_check_branch
      %559 = sbr.rel (%p557) target = $region48
    $region47: #{conv_block_forward.3} parent=5 // pred_region
      %s560 = ssub.s32 %s12, 2
      // Predicated region
      $region49: #{conv_block_forward.3} parent=47 // pred_check
        %p561 = pneg %p130
      $region50: #{conv_block_forward.3} parent=47 // pred_check_branch
        %563 = sbr.rel (%p561) target = $region52
      $region51: #{conv_block_forward.3} parent=47 // pred_region
        %p564 = scmp.lt.s32.totalorder %s18, 1
        %s565 = scalar_select %p564, %s18, 1
        %s566 = smul.addr %s565, 2
        %s567 = smul.addr %s566, 4
        %s568 = scalar_lea.vmem %s4, %s567
      $region52: #{conv_block_forward.3} parent=47 // pred_fallthru
        _
      // Predicated region
      $region53: #{conv_block_forward.3} parent=47 // pred_check
        %p569 = pneg %p156
      $region54: #{conv_block_forward.3} parent=47 // pred_check_branch
        %571 = sbr.rel (%p569) target = $region56
      $region55: #{conv_block_forward.3} parent=47 // pred_region
        %p572 = scmp.lt.s32.totalorder %s18, 1
        %s573 = scalar_select %p572, %s18, 1
        %s574 = smul.addr %s573, 8
        %s575 = scalar_lea.vmem %s5, %s574
      $region56: #{conv_block_forward.3} parent=47 // pred_fallthru
        _
    $region48: #{conv_block_forward.3} parent=5 // pred_fallthru
      _
  $region6: #{conv_block_forward.3} parent=0 // loop_footer
    %s16 = sadd.s32 1, %s12
  $region7: #{conv_block_forward.3} parent=0 // loop_footer_branch
    %11 = sbr.rel target = $region3
  $region8: #{conv_block_forward.3} parent=0 // loop_exit
    _

</llo_original>
